<compile_context>
chip_gen: v7x
topology: tpu7x:2x2x1
jax: 0.10.0
libtpu: 0.0.40
codegen_flags: <defaults>
</compile_context>

<pallas_src>
import functools

import jax
import jax.numpy as jnp
from jax.experimental import pallas as pl
from jax.experimental.pallas import tpu as pltpu


def _round_up(x, m):
    return (x + m - 1) // m * m


def _vmem_capacity_bytes():
    try:
        cap = int(getattr(pltpu.get_tpu_info(), "vmem_capacity_bytes", 0))
        if cap >= 16 * 1024 * 1024:
            return cap
    except Exception:
        pass
    return 64 * 1024 * 1024  # v7x per-TensorCore VMEM; conservative everywhere.


def _vmem_need_bytes(tb, tn, K, mxu_bytes, logits_bytes, return_logits):
    lane = 128
    need = 2 * tb * K * mxu_bytes            # inputs block (double-buffered)
    need += 2 * K * tn * mxu_bytes           # lut block
    if return_logits:
        need += 2 * tb * tn * logits_bytes   # logits out block
    need += 2 * tb * lane * 4                # targets block (lane-padded int32)
    need += 2 * tb * lane * 4                # nll out block (lane-padded f32)
    need += 3 * tb * lane * 4                # m / l / t scratch
    need += 1 << 20                          # compiler-internal scratch slack
    return need


def _oim_loss_kernel(tgt_ref, x_ref, lut_ref, *refs,
                     scalar, num_valid_cols, mask_cols, return_logits):
    # refs = [logits_ref?], nll_ref, m_scr, l_scr, t_scr
    if return_logits:
        logits_ref, nll_ref, m_scr, l_scr, t_scr = refs
    else:
        nll_ref, m_scr, l_scr, t_scr = refs
        logits_ref = None

    j = pl.program_id(1)
    neg = jnp.float32(jnp.finfo(jnp.float32).min)   # finite, not -inf (NaN-safe)

    @pl.when(j == 0)
    def _init():
        m_scr[...] = jnp.full_like(m_scr, neg)
        l_scr[...] = jnp.zeros_like(l_scr)
        t_scr[...] = jnp.zeros_like(t_scr)

    # bf16 operands, f32 accumulation on the MXU.  lut is the mm RHS with NO
    # transpose, exactly as in the reference.
    logits = jnp.dot(x_ref[...], lut_ref[...],
                     preferred_element_type=jnp.float32) * scalar   # (tb, tn) f32
    if logits_ref is not None:
        logits_ref[...] = logits.astype(logits_ref.dtype)

    tb, tn = logits.shape
    col = jax.lax.broadcasted_iota(jnp.int32, (tb, tn), 1) + j * tn

    # Mask padded LUT columns (streamed path only) with a large finite negative.
    z = jnp.where(col < num_valid_cols, logits, neg) if mask_cols else logits

    # Raw target logit (each target index lands in exactly one class tile).
    # TODO(synk): a target outside [0, num_classes) silently contributes no
    # target term instead of erroring (gather-OOB-like behavior).
    hit = col == tgt_ref[...]
    t_scr[...] += jnp.sum(jnp.where(hit, logits, 0.0), axis=-1, keepdims=True)

    # Online softmax across class tiles (degenerates to one plain pass when the
    # LUT is resident and there is a single class tile).
    m_prev = m_scr[...]
    m_new = jnp.maximum(m_prev, jnp.max(z, axis=-1, keepdims=True))
    alpha = jnp.exp(m_prev - m_new)
    l_scr[...] = alpha * l_scr[...] + jnp.sum(jnp.exp(z - m_new),
                                              axis=-1, keepdims=True)
    m_scr[...] = m_new

    @pl.when(j == pl.num_programs(1) - 1)
    def _finalize():
        # per-sample NLL = logsumexp - target_logit
        nll_ref[...] = m_scr[...] + jnp.log(l_scr[...]) - t_scr[...]


def oim_loss(inputs, targets, lut, scalar=1.0, *,
             batch_tile=512, class_tile=2048,
             mxu_dtype=jnp.bfloat16, logits_dtype=jnp.bfloat16,
             return_logits=True):
    """Pallas OIMLoss.forward.  Returns (loss, scaled_logits or None)."""
    B, K = inputs.shape
    C, F_ = lut.shape
    if C != K:
        raise ValueError("reference `inputs.mm(lut)` (no transpose) requires "
                         "num_classes == num_features")
    N = F_  # class axis of the logits (== C == F in the reference)

    mxu_bytes = jnp.dtype(mxu_dtype).itemsize
    out_bytes = jnp.dtype(logits_dtype).itemsize
    budget = _vmem_capacity_bytes() * 3 // 4      # leave headroom (48 MiB on v7x)

    # ---------------- tile selection ----------------
    b8 = _round_up(B, 8)
    tb = max(8, min(int(batch_tile), b8))

    def need(tb_, tn_):
        return _vmem_need_bytes(tb_, tn_, K, mxu_bytes, out_bytes, return_logits)

    if need(tb, N) <= budget:
        # Resident LUT: single class tile, constant block index -> DMA'd once.
        # Split the batch into >=2 tiles so both v7x TensorCores get work; free
        # here because there is no LUT re-stream penalty.
        if b8 >= 16:
            tb = max(8, min(tb, _round_up(-(-B // 2), 8)))
        tn = N
    else:
        # Streamed LUT: lane-dense class tiles + online softmax across them.
        tn = min(_round_up(int(class_tile), 128), _round_up(N, 128))
        while tn > 128 and need(tb, tn) > budget:
            tn -= 128
        while tb > 8 and need(tb, tn) > budget:
            tb = max(8, _round_up(tb // 2, 8))

    n_bt = -(-B // tb)
    n_ct = -(-N // tn)
    grid = (n_bt, n_ct)
    mask_cols = (N % tn) != 0

    # ---------------- operands (no pads, no output slices) ----------------
    x = inputs if inputs.dtype == mxu_dtype else inputs.astype(mxu_dtype)
    w = lut if lut.dtype == mxu_dtype else lut.astype(mxu_dtype)
    tgt = targets.astype(jnp.int32).reshape(B, 1)

    kernel = functools.partial(
        _oim_loss_kernel,
        scalar=float(scalar),
        num_valid_cols=N,
        mask_cols=mask_cols,
        return_logits=return_logits,
    )

    out_shape = []
    out_specs = []
    if return_logits:
        out_shape.append(jax.ShapeDtypeStruct((B, N), logits_dtype))
        out_specs.append(pl.BlockSpec((tb, tn), lambda i, j: (i, j)))
    out_shape.append(jax.ShapeDtypeStruct((B, 1), jnp.float32))   # per-sample NLL
    out_specs.append(pl.BlockSpec((tb, 1), lambda i, j: (i, 0)))

    lut_streams = 1 if n_ct == 1 else n_bt        # resident vs re-streamed
    cost = pl.CostEstimate(
        flops=2 * B * N * K,
        transcendentals=B * N,                    # exp in the (online) softmax
        bytes_accessed=int(B * K * mxu_bytes
                           + lut_streams * K * N * mxu_bytes
                           + (B * N * out_bytes if return_logits else 0)
                           + B * 4 * 2),          # targets + per-sample NLL
    )

    outs = pl.pallas_call(
        kernel,
        out_shape=tuple(out_shape),
        grid=grid,
        in_specs=[
            pl.BlockSpec((tb, 1), lambda i, j: (i, 0)),   # targets
            pl.BlockSpec((tb, K), lambda i, j: (i, 0)),   # inputs (MXU LHS)
            pl.BlockSpec((K, tn), lambda i, j: (0, j)),   # lut (MXU RHS, no T)
        ],
        out_specs=tuple(out_specs),
        scratch_shapes=[
            pltpu.VMEM((tb, 1), jnp.float32),   # running max
            pltpu.VMEM((tb, 1), jnp.float32),   # running sum-exp
            pltpu.VMEM((tb, 1), jnp.float32),   # target logit
        ],
        compiler_params=pltpu.CompilerParams(
            dimension_semantics=("parallel", "arbitrary"),
            vmem_limit_bytes=int(budget),
        ),
        cost_estimate=cost,
    )(tgt, x, w)

    if return_logits:
        logits, nll = outs
    else:
        (nll,) = outs
        logits = None

    # weight=None, size_average=True  ->  plain mean over the real batch rows
    # (out_shape is the un-padded (B, 1), so no padded rows ever reach here).
    loss = jnp.mean(nll)
    return loss, logits


def _reference(inputs, targets, lut, scalar):
    # Same bf16-operand / f32-accumulate numerics as the kernel.
    logits = jnp.dot(inputs.astype(jnp.bfloat16), lut.astype(jnp.bfloat16),
                     preferred_element_type=jnp.float32) * scalar
    logp = jax.nn.log_softmax(logits, axis=-1)
    nll = -jnp.take_along_axis(logp, targets[:, None].astype(jnp.int32), axis=-1)
    return jnp.mean(nll), logits


if __name__ == "__main__":
    B = 8
    NUM_FEATURES = 128
    NUM_CLASSES = 128       # reference mm (no transpose) forces C == F
    SCALAR = 10.0

    key = jax.random.PRNGKey(0)
    k_x, k_lut, k_t = jax.random.split(key, 3)

    # L2-normalized feature vectors (typical OIM usage).
    x = jax.random.normal(k_x, (B, NUM_FEATURES), dtype=jnp.float32)
    x = x / jnp.linalg.norm(x, axis=-1, keepdims=True)

    # __init__ registers zeros; fill deterministically (row-normalized, like
    # post-update LUT entries) so the matmul / CE path is actually exercised.
    lut = jax.random.normal(k_lut, (NUM_CLASSES, NUM_FEATURES), dtype=jnp.float32)
    lut = lut / jnp.linalg.norm(lut, axis=-1, keepdims=True)

    targets = jax.random.randint(k_t, (B,), 0, NUM_CLASSES, dtype=jnp.int32)

    fn = jax.jit(oim_loss, static_argnames=("scalar",))
    loss, logits = fn(x, targets, lut, scalar=SCALAR)
    jax.block_until_ready((loss, logits))

    ref_loss, ref_logits = _reference(x, targets, lut, SCALAR)
    assert logits.shape == ref_logits.shape
    max_err = float(jnp.max(jnp.abs(logits.astype(jnp.float32) - ref_logits)))
    assert jnp.allclose(logits.astype(jnp.float32), ref_logits,
                        atol=5e-2, rtol=2e-2), max_err
    assert jnp.allclose(loss, ref_loss, atol=1e-2, rtol=1e-2), (
        float(loss), float(ref_loss))

    # TODO(synk): the LUT momentum update lives in OIM.backward (training-time
    # in-place buffer mutation), not in the forward pass, so it is omitted here.

    print("KERNEL_OK")
</pallas_src>

<mosaic_0001>
module attributes {stable_mosaic.version = 11 : i64} {
  func.func @_oim_loss_kernel(%arg0: i32, %arg1: i32, %arg2: memref<8x1xi32, #tpu.memory_space<vmem>>, %arg3: memref<8x128xbf16, #tpu.memory_space<vmem>>, %arg4: memref<128x128xbf16, #tpu.memory_space<vmem>>, %arg5: memref<8x128xbf16, #tpu.memory_space<vmem>>, %arg6: memref<8x1xf32, #tpu.memory_space<vmem>>, %arg7: memref<8x1xf32, #tpu.memory_space<vmem>>, %arg8: memref<8x1xf32, #tpu.memory_space<vmem>>, %arg9: memref<8x1xf32, #tpu.memory_space<vmem>>) attributes {dimension_semantics = [#tpu.dimension_semantics<parallel>, #tpu.dimension_semantics<arbitrary>], iteration_bounds = array<i64: 1, 1>, scalar_prefetch = 0 : i64, scratch_operands = 3 : i64, tpu.core_type = #tpu.core_type<tc>, window_params = [{transform_indices = @transform_0, window_bounds = array<i64: 8, 1>}, {transform_indices = @transform_1, window_bounds = array<i64: 8, 128>}, {transform_indices = @transform_2, window_bounds = array<i64: 128, 128>}, {transform_indices = @transform_3, window_bounds = array<i64: 8, 128>}, {transform_indices = @transform_4, window_bounds = array<i64: 8, 1>}]} {
    %c0_i32 = arith.constant 0 : i32
    %0 = arith.cmpi eq, %arg1, %c0_i32 : i32
    %1 = arith.extui %0 : i1 to i32
    %cst = arith.constant -3.40282347E+38 : f32
    %c0_i32_0 = arith.constant 0 : i32
    %2 = arith.cmpi ne, %1, %c0_i32_0 : i32
    scf.if %2 {
      %43 = vector.broadcast %cst : f32 to vector<8x1xf32>
      %c0_28 = arith.constant 0 : index
      %c0_29 = arith.constant 0 : index
      %44 = vector.load %arg7[%c0_28, %c0_29] : memref<8x1xf32, #tpu.memory_space<vmem>>, vector<8x1xf32>
      tpu.vector_store %arg7[%c0_28, %c0_29], %43 {strides = array<i32>} : memref<8x1xf32, #tpu.memory_space<vmem>>, vector<8x1xf32>,
      %cst_30 = arith.constant 0.000000e+00 : f32
      %45 = vector.broadcast %cst_30 : f32 to vector<8x1xf32>
      %c0_31 = arith.constant 0 : index
      %c0_32 = arith.constant 0 : index
      %46 = vector.load %arg8[%c0_31, %c0_32] : memref<8x1xf32, #tpu.memory_space<vmem>>, vector<8x1xf32>
      tpu.vector_store %arg8[%c0_31, %c0_32], %45 {strides = array<i32>} : memref<8x1xf32, #tpu.memory_space<vmem>>, vector<8x1xf32>,
      %cst_33 = arith.constant 0.000000e+00 : f32
      %47 = vector.broadcast %cst_33 : f32 to vector<8x1xf32>
      %c0_34 = arith.constant 0 : index
      %c0_35 = arith.constant 0 : index
      %48 = vector.load %arg9[%c0_34, %c0_35] : memref<8x1xf32, #tpu.memory_space<vmem>>, vector<8x1xf32>
      tpu.vector_store %arg9[%c0_34, %c0_35], %47 {strides = array<i32>} : memref<8x1xf32, #tpu.memory_space<vmem>>, vector<8x1xf32>,
    } else {
    }
    %c0 = arith.constant 0 : index
    %c0_1 = arith.constant 0 : index
    %3 = vector.load %arg3[%c0, %c0_1] : memref<8x128xbf16, #tpu.memory_space<vmem>>, vector<8x128xbf16>
    %c0_2 = arith.constant 0 : index
    %c0_3 = arith.constant 0 : index
    %4 = vector.load %arg4[%c0_2, %c0_3] : memref<128x128xbf16, #tpu.memory_space<vmem>>, vector<128x128xbf16>
    %cst_4 = arith.constant dense<0.000000e+00> : vector<8x128xf32>
    %5 = tpu.matmul %3, %4, %cst_4 {dimension_numbers = #tpu.dot_dimension_numbers<[1], [0], [0], [1], [0, 0, 1, 1], [], []>} : vector<8x128xbf16>, vector<128x128xbf16>, vector<8x128xf32> -> vector<8x128xf32>
    %cst_5 = arith.constant 1.000000e+01 : f32
    %6 = vector.broadcast %cst_5 : f32 to vector<8x128xf32>
    %7 = arith.mulf %5, %6 : vector<8x128xf32>
    %8 = arith.truncf %7 : vector<8x128xf32> to vector<8x128xbf16>
    %c0_6 = arith.constant 0 : index
    %c0_7 = arith.constant 0 : index
    %9 = vector.load %arg5[%c0_6, %c0_7] : memref<8x128xbf16, #tpu.memory_space<vmem>>, vector<8x128xbf16>
    tpu.vector_store %arg5[%c0_6, %c0_7], %8 {strides = array<i32>} : memref<8x128xbf16, #tpu.memory_space<vmem>>, vector<8x128xbf16>,
    %10 = tpu.iota {dimensions = array<i32: 1>} : vector<8x128xi32>
    %c128_i32 = arith.constant 128 : i32
    %11 = arith.muli %arg1, %c128_i32 : i32
    %12 = vector.broadcast %11 : i32 to vector<8x128xi32>
    %13 = arith.addi %10, %12 : vector<8x128xi32>
    %c0_8 = arith.constant 0 : index
    %c0_9 = arith.constant 0 : index
    %14 = vector.load %arg2[%c0_8, %c0_9] : memref<8x1xi32, #tpu.memory_space<vmem>>, vector<8x1xi32>
    %15 = vector.broadcast %14 : vector<8x1xi32> to vector<8x128xi32>
    %16 = arith.cmpi eq, %13, %15 : vector<8x128xi32>
    %c0_10 = arith.constant 0 : index
    %c0_11 = arith.constant 0 : index
    %17 = vector.load %arg9[%c0_10, %c0_11] : memref<8x1xf32, #tpu.memory_space<vmem>>, vector<8x1xf32>
    %cst_12 = arith.constant 0.000000e+00 : f32
    %18 = vector.broadcast %cst_12 : f32 to vector<8x128xf32>
    %19 = arith.select %16, %7, %18 : vector<8x128xi1>, vector<8x128xf32>
    %cst_13 = arith.constant dense<0.000000e+00> : vector<8xf32>
    %20 = vector.multi_reduction <add>, %19, %cst_13 [1] : vector<8x128xf32> to vector<8xf32>
    %21 = vector.shape_cast %20 : vector<8xf32> to vector<8x1xf32>
    %22 = arith.addf %17, %21 : vector<8x1xf32>
    %c0_14 = arith.constant 0 : index
    %c0_15 = arith.constant 0 : index
    %23 = vector.load %arg9[%c0_14, %c0_15] : memref<8x1xf32, #tpu.memory_space<vmem>>, vector<8x1xf32>
    tpu.vector_store %arg9[%c0_14, %c0_15], %22 {strides = array<i32>} : memref<8x1xf32, #tpu.memory_space<vmem>>, vector<8x1xf32>,
    %c0_16 = arith.constant 0 : index
    %c0_17 = arith.constant 0 : index
    %24 = vector.load %arg7[%c0_16, %c0_17] : memref<8x1xf32, #tpu.memory_space<vmem>>, vector<8x1xf32>
    %cst_18 = arith.constant dense<0xFF800000> : vector<8xf32>
    %25 = vector.multi_reduction <maximumf>, %7, %cst_18 [1] : vector<8x128xf32> to vector<8xf32>
    %26 = vector.shape_cast %25 : vector<8xf32> to vector<8x1xf32>
    %27 = arith.maximumf %24, %26 : vector<8x1xf32>
    %28 = arith.subf %24, %27 : vector<8x1xf32>
    %29 = math.exp %28 : vector<8x1xf32>
    %c0_19 = arith.constant 0 : index
    %c0_20 = arith.constant 0 : index
    %30 = vector.load %arg8[%c0_19, %c0_20] : memref<8x1xf32, #tpu.memory_space<vmem>>, vector<8x1xf32>
    %31 = arith.mulf %29, %30 : vector<8x1xf32>
    %32 = vector.broadcast %27 : vector<8x1xf32> to vector<8x128xf32>
    %33 = arith.subf %7, %32 : vector<8x128xf32>
    %34 = math.exp %33 : vector<8x128xf32>
    %cst_21 = arith.constant dense<0.000000e+00> : vector<8xf32>
    %35 = vector.multi_reduction <add>, %34, %cst_21 [1] : vector<8x128xf32> to vector<8xf32>
    %36 = vector.shape_cast %35 : vector<8xf32> to vector<8x1xf32>
    %37 = arith.addf %31, %36 : vector<8x1xf32>
    %c0_22 = arith.constant 0 : index
    %c0_23 = arith.constant 0 : index
    %38 = vector.load %arg8[%c0_22, %c0_23] : memref<8x1xf32, #tpu.memory_space<vmem>>, vector<8x1xf32>
    tpu.vector_store %arg8[%c0_22, %c0_23], %37 {strides = array<i32>} : memref<8x1xf32, #tpu.memory_space<vmem>>, vector<8x1xf32>,
    %c0_24 = arith.constant 0 : index
    %c0_25 = arith.constant 0 : index
    %39 = vector.load %arg7[%c0_24, %c0_25] : memref<8x1xf32, #tpu.memory_space<vmem>>, vector<8x1xf32>
    tpu.vector_store %arg7[%c0_24, %c0_25], %27 {strides = array<i32>} : memref<8x1xf32, #tpu.memory_space<vmem>>, vector<8x1xf32>,
    %c0_i32_26 = arith.constant 0 : i32
    %40 = arith.cmpi eq, %arg1, %c0_i32_26 : i32
    %41 = arith.extui %40 : i1 to i32
    %c0_i32_27 = arith.constant 0 : i32
    %42 = arith.cmpi ne, %41, %c0_i32_27 : i32
    scf.if %42 {
      %c0_28 = arith.constant 0 : index
      %c0_29 = arith.constant 0 : index
      %43 = vector.load %arg7[%c0_28, %c0_29] : memref<8x1xf32, #tpu.memory_space<vmem>>, vector<8x1xf32>
      %c0_30 = arith.constant 0 : index
      %c0_31 = arith.constant 0 : index
      %44 = vector.load %arg8[%c0_30, %c0_31] : memref<8x1xf32, #tpu.memory_space<vmem>>, vector<8x1xf32>
      %45 = math.log %44 : vector<8x1xf32>
      %46 = arith.addf %43, %45 : vector<8x1xf32>
      %c0_32 = arith.constant 0 : index
      %c0_33 = arith.constant 0 : index
      %47 = vector.load %arg9[%c0_32, %c0_33] : memref<8x1xf32, #tpu.memory_space<vmem>>, vector<8x1xf32>
      %48 = arith.subf %46, %47 : vector<8x1xf32>
      %c0_34 = arith.constant 0 : index
      %c0_35 = arith.constant 0 : index
      %49 = vector.load %arg6[%c0_34, %c0_35] : memref<8x1xf32, #tpu.memory_space<vmem>>, vector<8x1xf32>
      tpu.vector_store %arg6[%c0_34, %c0_35], %48 {strides = array<i32>} : memref<8x1xf32, #tpu.memory_space<vmem>>, vector<8x1xf32>,
    } else {
    }
    return
  }
  func.func @transform_0(%arg0: i32, %arg1: i32) -> (i32, i32) {
    %c0_i32 = arith.constant 0 : i32
    %c0_i32_0 = arith.constant 0 : i32
    return %arg0, %c0_i32 : i32, i32
  }
  func.func @transform_1(%arg0: i32, %arg1: i32) -> (i32, i32) {
    %c0_i32 = arith.constant 0 : i32
    %c0_i32_0 = arith.constant 0 : i32
    return %arg0, %c0_i32 : i32, i32
  }
  func.func @transform_2(%arg0: i32, %arg1: i32) -> (i32, i32) {
    %c0_i32 = arith.constant 0 : i32
    %c0_i32_0 = arith.constant 0 : i32
    return %c0_i32, %arg1 : i32, i32
  }
  func.func @transform_3(%arg0: i32, %arg1: i32) -> (i32, i32) {
    %c0_i32 = arith.constant 0 : i32
    return %arg0, %arg1 : i32, i32
  }
  func.func @transform_4(%arg0: i32, %arg1: i32) -> (i32, i32) {
    %c0_i32 = arith.constant 0 : i32
    %c0_i32_0 = arith.constant 0 : i32
    return %arg0, %c0_i32 : i32, i32
  }
}

</mosaic_0001>

<llo_original>
// kernel: oim_loss.1
$region0: #{oim_loss.1}
  #allocation0 [shape = 'u32[]', space=smem, size = 0x4, offset = 0x4, fixed_abs, tag = 'smem constant byte address 0x4 - core index']
  #allocation1 [shape = 'u32[144,128]{1,0:T(1,128)}', space=vmem, size = 0x12000, scoped, tag = 'internal scratch']
  #allocation2 [shape = 'f32[8,1]{1,0:T(8,128)}', space=vmem, size = 0x1000, scoped, tag = 'scratch operand']
  #allocation3 [shape = 'f32[8,1]{1,0:T(8,128)}', space=vmem, size = 0x1000, scoped, tag = 'scratch operand']
  #allocation4 [shape = 'f32[8,1]{1,0:T(8,128)}', space=vmem, size = 0x1000, scoped, tag = 'scratch operand']
  %s0 = inlined_call_operand.vmem [shape: s32[8,1], index: 0, kind: input, shape index: {}]
  %s1 = inlined_call_operand.vmem [shape: bf16[8,128], index: 1, kind: input, shape index: {}]
  %s2 = inlined_call_operand.vmem [shape: bf16[128,128], index: 2, kind: input, shape index: {}]
  %s3 = inlined_call_operand.hbm [shape: bf16[8,128], index: 3, kind: output, shape index: {0}]
  %s4 = inlined_call_operand.vmem [shape: f32[8,1], index: 4, kind: output, shape index: {1}]
  %5 = xla_tuple %s3, %s4
  %s6 = sld [smem:[#allocation0]]
  $region38: #{oim_loss.1} parent=0
    _
  %s8 = ssub.s32 1, %s6
  %s9 = scalar_select 0, %s8, %s6
  $region1: #{oim_loss.1} parent=0
    #allocation5 [shape = 'u8[2048]{0}', space=vmem, size = 0x800, scoped, tag = 'output window, operand 0, single buffered']
    #allocation6 [shape = 's32[1]{0}', space=sflag, size = 0x4, scoped, tag = 'scoped memory for oim_loss.1']
    %10 = vsyncpa [#allocation6], 0
    // Predicated region
    $region2: #{oim_loss.1} parent=1 // pred_check
      _
    $region3: #{oim_loss.1} parent=1 // pred_check_branch
      %12 = sbr.rel (0) target = $region5
    $region4: #{oim_loss.1} parent=1 // pred_region
      _
    $region5: #{oim_loss.1} parent=1 // pred_fallthru
      _
    // Predicated region
    $region6: #{oim_loss.1} parent=1 // pred_check
      _
    $region7: #{oim_loss.1} parent=1 // pred_check_branch
      %14 = sbr.rel (0) target = $region9
    $region8: #{oim_loss.1} parent=1 // pred_region
      _
    $region9: #{oim_loss.1} parent=1 // pred_fallthru
      _
    // Predicated region
    $region10: #{oim_loss.1} parent=1 // pred_check
      _
    $region11: #{oim_loss.1} parent=1 // pred_check_branch
      %16 = sbr.rel (0) target = $region13
    $region12: #{oim_loss.1} parent=1 // pred_region
      _
    $region13: #{oim_loss.1} parent=1 // pred_fallthru
      _
    %p18 = scmp.eq.s32.totalorder 0, 0
    // Predicated region
    $region14: #{oim_loss.1} parent=1 // pred_check
      %p19 = pneg %p18
    $region15: #{oim_loss.1} parent=1 // pred_check_branch
      %21 = sbr.rel (%p19) target = $region17
    $region16: #{oim_loss.1} parent=1 // pred_region
      %vm22 = vcmask 7168
      %23 = vst.msk [vmem:[#allocation2] sm:$0xff] %vm22, -3.4028235e+38
      %24 = vst.msk [vmem:[#allocation3] sm:$0xff] %vm22, 0.0
      %25 = vst.msk [vmem:[#allocation4] sm:$0xff] %vm22, 0.0
    $region17: #{oim_loss.1} parent=1 // pred_fallthru
      _
    %v26 = vld [vmem:[%s1] sm:$0xf]
    %v27 = vld [vmem:[%s2] sm:$0xf]
    %v28 = vld [vmem:[%s2 + $0x4] sm:$0xf]
    %v29 = vld [vmem:[%s2 + $0x8] sm:$0xf]
    %v30 = vld [vmem:[%s2 + $0xc] sm:$0xf]
    %v31 = vld [vmem:[%s2 + $0x10] sm:$0xf]
    %v32 = vld [vmem:[%s2 + $0x14] sm:$0xf]
    %v33 = vld [vmem:[%s2 + $0x18] sm:$0xf]
    %v34 = vld [vmem:[%s2 + $0x1c] sm:$0xf]
    %v35 = vld [vmem:[%s2 + $0x20] sm:$0xf]
    %v36 = vld [vmem:[%s2 + $0x24] sm:$0xf]
    %v37 = vld [vmem:[%s2 + $0x28] sm:$0xf]
    %v38 = vld [vmem:[%s2 + $0x2c] sm:$0xf]
    %v39 = vld [vmem:[%s2 + $0x30] sm:$0xf]
    %v40 = vld [vmem:[%s2 + $0x34] sm:$0xf]
    %v41 = vld [vmem:[%s2 + $0x38] sm:$0xf]
    %v42 = vld [vmem:[%s2 + $0x3c] sm:$0xf]
    %v59 = vunpack.c.l.b16 %v27
    %v60 = vunpack.c.l.b16 %v28
    %v61 = vunpack.c.l.b16 %v29
    %v62 = vunpack.c.l.b16 %v30
    %v63 = vunpack.c.l.b16 %v31
    %v64 = vunpack.c.l.b16 %v32
    %v65 = vunpack.c.l.b16 %v33
    %v66 = vunpack.c.l.b16 %v34
    %v67 = vunpack.c.l.b16 %v35
    %v68 = vunpack.c.l.b16 %v36
    %v69 = vunpack.c.l.b16 %v37
    %v70 = vunpack.c.l.b16 %v38
    %v71 = vunpack.c.l.b16 %v39
    %v72 = vunpack.c.l.b16 %v40
    %v73 = vunpack.c.l.b16 %v41
    %v74 = vunpack.c.l.b16 %v42
    %v75 = vpack.c.b16 %v60, %v59
    %v76 = vpack.c.b16 %v62, %v61
    %v77 = vpack.c.b16 %v64, %v63
    %v78 = vpack.c.b16 %v66, %v65
    %v79 = vpack.c.b16 %v68, %v67
    %v80 = vpack.c.b16 %v70, %v69
    %v81 = vpack.c.b16 %v72, %v71
    %v82 = vpack.c.b16 %v74, %v73
    %91 = vmatprep.subr.bf16.mxu0 0
    %92 = vmatpush1.bf16.msra.mxu0 %v75
    %93 = vmatprep.subr.bf16.mxu0 0
    %94 = vmatpush1.bf16.msra.mxu0 %v76
    %95 = vmatprep.subr.bf16.mxu0 0
    %96 = vmatpush1.bf16.msra.mxu0 %v77
    %97 = vmatprep.subr.bf16.mxu0 0
    %98 = vmatpush1.bf16.msra.mxu0 %v78
    %99 = vmatprep.subr.bf16.mxu0 0
    %100 = vmatpush1.bf16.msra.mxu0 %v79
    %101 = vmatprep.subr.bf16.mxu0 0
    %102 = vmatpush1.bf16.msra.mxu0 %v80
    %103 = vmatprep.subr.bf16.mxu0 0
    %104 = vmatpush1.bf16.msra.mxu0 %v81
    %105 = vmatprep.subr.bf16.mxu0 0
    %106 = vmatpush1.bf16.msra.mxu0 %v82
    %107 = vmatprep.subr.bf16.mxu0 0
    %108 = vmatpush1.bf16.msra.mxu0 0
    %109 = vmatprep.subr.bf16.mxu0 0
    %110 = vmatpush1.bf16.msra.mxu0 0
    %111 = vmatprep.subr.bf16.mxu0 0
    %112 = vmatpush1.bf16.msra.mxu0 0
    %113 = vmatprep.subr.bf16.mxu0 0
    %114 = vmatpush1.bf16.msra.mxu0 0
    %115 = vmatprep.subr.bf16.mxu0 0
    %116 = vmatpush1.bf16.msra.mxu0 0
    %117 = vmatprep.subr.bf16.mxu0 0
    %118 = vmatpush1.bf16.msra.mxu0 0
    %119 = vmatprep.subr.bf16.mxu0 0
    %120 = vmatpush1.bf16.msra.mxu0 0
    %121 = vmatprep.subr.bf16.mxu0 0
    %122 = vmatpush1.bf16.msra.mxu0 0
    %123 = vmatprep.mubr.bf16.mxu0 0
    %124 = vmatmul.mubr.bf16.gmra.mrb[0].mxu0 %v26
    %v125 = vpop.f32.mrb[0].mxu0
    %v126 = vadd.f32 0.0, %v125
    %v127 = vpop.f32.mrb[0].mxu0
    %v128 = vpop.f32.mrb[0].mxu0
    %v129 = vpop.f32.mrb[0].mxu0
    %130 = vdwg.mxu0
    %v131 = vmul.f32 %v126, 10.0
    %v132 = vpack.c.bf16 %v131, %v131
    %133 = vst [vmem:[#allocation5] sm:$0xf] %v132
    %v134 = vlaneseq
    %v135 = vand.u32 %v134, 127
    %s136 = smul.u32 0, 128
    %v137 = vstv %s136
    %v138 = vadd.s32 %v135, %v137
    %v139 = vld [vmem:[%s0] sm:$0xff]
    %140 = vset.pattern.permute.xlu0 0
    %141 = vperm.xlu0 %140, %v139
    %v142 = vpop.permute.xlu0 %141
    %vm143 = vcmp.eq.s32.totalorder %v138, %v142
    %v144 = vld [vmem:[#allocation4] sm:$0xff]
    %v145 = vsel %vm143, %v131, 0.0
    %146 = vadd.xlane.f32.xlu0 %v145
    %v147 = vpop.xlane.xlu0 %146
    %v148 = vadd.f32 %v144, %v147
    %vm149 = vcmask 7168
    %150 = vst.msk [vmem:[#allocation4] sm:$0xff] %vm149, %v148
    %v151 = vld [vmem:[#allocation2] sm:$0xff]
    %152 = vmax.xlane.f32.xlu0 %v131
    %v153 = vpop.xlane.xlu0 %152
    %v154 = vmax.f32 %v151, %v153
    %v155 = vsub.f32 %v151, %v154
    %v156 = vmul.f32 %v155, 1.442695
    %v157 = vpow.pop %v156
    %v158 = vld [vmem:[#allocation3] sm:$0xff]
    %v159 = vmul.f32 %v157, %v158
    %161 = vset.pattern.permute.xlu0 0
    %162 = vperm.xlu0 %161, %v154
    %v163 = vpop.permute.xlu0 %162
    %v165 = vsub.f32 %v131, %v163
    %v166 = vmul.f32 %v165, 1.442695
    %v167 = vpow.pop %v166
    %168 = vadd.xlane.f32.xlu0 %v167
    %v169 = vpop.xlane.xlu0 %168
    %v170 = vadd.f32 %v159, %v169
    %171 = vst.msk [vmem:[#allocation3] sm:$0xff] %vm149, %v170
    %172 = vst.msk [vmem:[#allocation2] sm:$0xff] %vm149, %v154
    // Predicated region
    $region18: #{oim_loss.1} parent=1 // pred_check
      %p173 = pneg %p18
    $region19: #{oim_loss.1} parent=1 // pred_check_branch
      %175 = sbr.rel (%p173) target = $region21
    $region20: #{oim_loss.1} parent=1 // pred_region
      %v176 = vld [vmem:[#allocation2] sm:$0xff]
      %v177 = vld [vmem:[#allocation3] sm:$0xff]
      %v178 = vlog2.pop %v177
      %v179 = vmul.f32 %v178, 0.6931472
      %v180 = vadd.f32 %v176, %v179
      %v181 = vld [vmem:[#allocation4] sm:$0xff]
      %v182 = vsub.f32 %v180, %v181
      %183 = vst.msk [vmem:[%s4] sm:$0xff] %vm149, %v182
    $region21: #{oim_loss.1} parent=1 // pred_fallthru
      _
    // Predicated region
    $region22: #{oim_loss.1} parent=1 // pred_check
      _
    $region23: #{oim_loss.1} parent=1 // pred_check_branch
      %185 = sbr.rel (0) target = $region25
    $region24: #{oim_loss.1} parent=1 // pred_region
      %s187 = ssub.s32 64, 64
      %188 = vsyncadd [#allocation6], %s187
      %s190 = sshll.u32 [#allocation5], 4
      %s191 = int_to_ptr.vmem [resolvable:$true] %s190
      %193 = dma.vmem_to_hbm [thread:$0]  %s191, 64, %s3, [#allocation6]
    $region25: #{oim_loss.1} parent=1 // pred_fallthru
      _
    // Predicated region
    $region26: #{oim_loss.1} parent=1 // pred_check
      _
    $region27: #{oim_loss.1} parent=1 // pred_check_branch
      %195 = sbr.rel (0) target = $region29
    $region28: #{oim_loss.1} parent=1 // pred_region
      _
    $region29: #{oim_loss.1} parent=1 // pred_fallthru
      _
    // Predicated region
    $region30: #{oim_loss.1} parent=1 // pred_check
      _
    $region31: #{oim_loss.1} parent=1 // pred_check_branch
      %197 = sbr.rel (0) target = $region33
    $region32: #{oim_loss.1} parent=1 // pred_region
      %198 = dma.done [#allocation6], 64
    $region33: #{oim_loss.1} parent=1 // pred_fallthru
      _
    // Predicated region
    $region34: #{oim_loss.1} parent=1 // pred_check
      _
    $region35: #{oim_loss.1} parent=1 // pred_check_branch
      %200 = sbr.rel (0) target = $region37
    $region36: #{oim_loss.1} parent=1 // pred_region
      _
    $region37: #{oim_loss.1} parent=1 // pred_fallthru
      _
    %201 = vsyncpa [#allocation6], 1

</llo_original>
